<compile_context>
chip_gen: v7x
topology: tpu7x:2x2x1
jax: 0.10.0
libtpu: 0.0.40
codegen_flags: <defaults>
</compile_context>

<pallas_src>
import jax
import jax.numpy as jnp
from jax.experimental import pallas as pl
from jax.experimental.pallas import tpu as pltpu


def _round_up(n, m):
    return ((n + m - 1) // m) * m


def fnn_kernel(x_ref, w1_ref, b1_ref, w2_ref, b2_ref, w3_ref, b3_ref, y_ref):
    # Layer 1: Linear + ReLU (MXU matmul, f32 accumulate; bias/ReLU in f32).
    h = jnp.dot(x_ref[...], w1_ref[...], preferred_element_type=jnp.float32)
    h = jnp.maximum(h + b1_ref[...].astype(jnp.float32), 0.0)
    h = h.astype(w2_ref.dtype)  # back to compute dtype for full-rate MXU
    # Layer 2: Linear + ReLU.
    h = jnp.dot(h, w2_ref[...], preferred_element_type=jnp.float32)
    h = jnp.maximum(h + b2_ref[...].astype(jnp.float32), 0.0)
    h = h.astype(w3_ref.dtype)
    # Layer 3: Linear (no activation).
    y = jnp.dot(h, w3_ref[...], preferred_element_type=jnp.float32)
    y = y + b3_ref[...].astype(jnp.float32)
    y_ref[...] = y.astype(y_ref.dtype)


def fnn_forward(x, w1, b1, w2, b2, w3, b3, *, block_m=256,
                compute_dtype=jnp.bfloat16, out_dtype=None):
    """Fused 3-layer MLP forward.  Weights are [in, out]; biases are [out]."""
    if out_dtype is None:
        out_dtype = compute_dtype

    batch, in_size = x.shape
    hidden1 = w1.shape[1]
    hidden2 = w2.shape[1]
    out_size = w3.shape[1]

    # ---- Pad to TPU-friendly shapes (lane dim -> x128, batch -> tile) ------
    in_p = _round_up(in_size, 128)
    h1_p = _round_up(hidden1, 128)
    h2_p = _round_up(hidden2, 128)
    out_p = _round_up(out_size, 128)
    tm = min(block_m, _round_up(batch, 8))
    batch_p = _round_up(batch, tm)

    cd = compute_dtype

    def pad2(a, rows, cols):
        return (jnp.zeros((rows, cols), cd)
                .at[:a.shape[0], :a.shape[1]].set(a.astype(cd)))

    xp = pad2(x, batch_p, in_p)
    w1p = pad2(w1, in_p, h1_p)
    w2p = pad2(w2, h1_p, h2_p)
    w3p = pad2(w3, h2_p, out_p)
    b1p = pad2(b1.reshape(1, -1), 1, h1_p)
    b2p = pad2(b2.reshape(1, -1), 1, h2_p)
    b3p = pad2(b3.reshape(1, -1), 1, out_p)

    grid = (batch_p // tm,)

    # ---- VMEM budget: resident weights + double-buffered x/y tiles ---------
    isz = jnp.dtype(cd).itemsize
    weight_bytes = (w1p.size + w2p.size + w3p.size
                    + b1p.size + b2p.size + b3p.size) * isz
    act_bytes = 2 * (tm * in_p * isz + tm * out_p * jnp.dtype(out_dtype).itemsize)
    vmem_limit = int(min(128 << 20,
                         max(16 << 20, 2 * (weight_bytes + act_bytes) + (4 << 20))))

    flops = 2 * batch_p * (in_p * h1_p + h1_p * h2_p + h2_p * out_p)
    bytes_accessed = int(weight_bytes + xp.size * isz
                         + batch_p * out_p * jnp.dtype(out_dtype).itemsize)

    const2 = lambda i: (0, 0)

    yp = pl.pallas_call(
        fnn_kernel,
        out_shape=jax.ShapeDtypeStruct((batch_p, out_p), out_dtype),
        grid=grid,
        in_specs=[
            pl.BlockSpec((tm, in_p), lambda i: (i, 0)),   # x: streamed over batch
            pl.BlockSpec((in_p, h1_p), const2),           # weights/biases: resident
            pl.BlockSpec((1, h1_p), const2),
            pl.BlockSpec((h1_p, h2_p), const2),
            pl.BlockSpec((1, h2_p), const2),
            pl.BlockSpec((h2_p, out_p), const2),
            pl.BlockSpec((1, out_p), const2),
        ],
        out_specs=pl.BlockSpec((tm, out_p), lambda i: (i, 0)),
        compiler_params=pltpu.CompilerParams(
            dimension_semantics=("parallel",),
            vmem_limit_bytes=vmem_limit,
        ),
        cost_estimate=pl.CostEstimate(
            flops=flops, transcendentals=0, bytes_accessed=bytes_accessed),
    )(xp, w1p, b1p, w2p, b2p, w3p, b3p)

    # Slice padding off.
    return yp[:batch, :out_size]


def xavier_normal(key, fan_in, fan_out):
    # Matches torch.nn.init.xavier_normal_: std = sqrt(2 / (fan_in + fan_out)).
    std = (2.0 / (fan_in + fan_out)) ** 0.5
    # Shape [fan_in, fan_out] (transposed vs PyTorch's [out, in]).
    return std * jax.random.normal(key, (fan_in, fan_out), dtype=jnp.float32)


if __name__ == "__main__":
    input_size, hidden_size, output_size = 16, 32, 8
    batch = 4

    key = jax.random.PRNGKey(0)
    kx, k1, k2, k3 = jax.random.split(key, 4)

    x = jax.random.normal(kx, (batch, input_size), dtype=jnp.float32)

    w1 = xavier_normal(k1, input_size, hidden_size)
    b1 = jnp.zeros((hidden_size,), dtype=jnp.float32)   # bias=0 per _init_weights
    w2 = xavier_normal(k2, hidden_size, hidden_size)
    b2 = jnp.zeros((hidden_size,), dtype=jnp.float32)
    w3 = xavier_normal(k3, hidden_size, output_size)
    b3 = jnp.zeros((output_size,), dtype=jnp.float32)

    y = fnn_forward(x, w1, b1, w2, b2, w3, b3)
    jax.block_until_ready(y)

    # Pure-JAX reference with the same bf16-cast / f32-accumulate discipline.
    cd, f32 = jnp.bfloat16, jnp.float32
    to = lambda a: a.astype(cd).astype(f32)
    h = jnp.maximum(to(x) @ to(w1) + b1, 0.0)
    h = jnp.maximum(to(h) @ to(w2) + b2, 0.0)
    ref = to(h) @ to(w3) + b3

    assert y.shape == (batch, output_size)
    assert y.dtype == cd
    assert jnp.allclose(y.astype(f32), ref.astype(cd).astype(f32),
                        atol=2e-2, rtol=2e-2)

    print("KERNEL_OK")
</pallas_src>

<mosaic_0001>
module attributes {stable_mosaic.version = 11 : i64} {
  func.func @fnn_kernel(%arg0: i32, %arg1: memref<8x128xbf16, #tpu.memory_space<vmem>>, %arg2: memref<128x128xbf16, #tpu.memory_space<vmem>>, %arg3: memref<1x128xbf16, #tpu.memory_space<vmem>>, %arg4: memref<128x128xbf16, #tpu.memory_space<vmem>>, %arg5: memref<1x128xbf16, #tpu.memory_space<vmem>>, %arg6: memref<128x128xbf16, #tpu.memory_space<vmem>>, %arg7: memref<1x128xbf16, #tpu.memory_space<vmem>>, %arg8: memref<8x128xbf16, #tpu.memory_space<vmem>>) attributes {dimension_semantics = [#tpu.dimension_semantics<parallel>], iteration_bounds = array<i64: 1>, scalar_prefetch = 0 : i64, scratch_operands = 0 : i64, tpu.core_type = #tpu.core_type<tc>, window_params = [{transform_indices = @transform_0, window_bounds = array<i64: 8, 128>}, {pipeline_mode = #tpu.pipeline_mode<synchronous>, transform_indices = @transform_1, window_bounds = array<i64: 128, 128>}, {pipeline_mode = #tpu.pipeline_mode<synchronous>, transform_indices = @transform_2, window_bounds = array<i64: 1, 128>}, {pipeline_mode = #tpu.pipeline_mode<synchronous>, transform_indices = @transform_3, window_bounds = array<i64: 128, 128>}, {pipeline_mode = #tpu.pipeline_mode<synchronous>, transform_indices = @transform_4, window_bounds = array<i64: 1, 128>}, {pipeline_mode = #tpu.pipeline_mode<synchronous>, transform_indices = @transform_5, window_bounds = array<i64: 128, 128>}, {pipeline_mode = #tpu.pipeline_mode<synchronous>, transform_indices = @transform_6, window_bounds = array<i64: 1, 128>}, {transform_indices = @transform_7, window_bounds = array<i64: 8, 128>}]} {
    %c0 = arith.constant 0 : index
    %c0_0 = arith.constant 0 : index
    %0 = vector.load %arg1[%c0, %c0_0] : memref<8x128xbf16, #tpu.memory_space<vmem>>, vector<8x128xbf16>
    %c0_1 = arith.constant 0 : index
    %c0_2 = arith.constant 0 : index
    %1 = vector.load %arg2[%c0_1, %c0_2] : memref<128x128xbf16, #tpu.memory_space<vmem>>, vector<128x128xbf16>
    %cst = arith.constant dense<0.000000e+00> : vector<8x128xf32>
    %2 = tpu.matmul %0, %1, %cst {dimension_numbers = #tpu.dot_dimension_numbers<[1], [0], [0], [1], [0, 0, 1, 1], [], []>} : vector<8x128xbf16>, vector<128x128xbf16>, vector<8x128xf32> -> vector<8x128xf32>
    %c0_3 = arith.constant 0 : index
    %c0_4 = arith.constant 0 : index
    %3 = vector.load %arg3[%c0_3, %c0_4] : memref<1x128xbf16, #tpu.memory_space<vmem>>, vector<1x128xbf16>
    %4 = arith.extf %3 : vector<1x128xbf16> to vector<1x128xf32>
    %5 = vector.broadcast %4 : vector<1x128xf32> to vector<8x128xf32>
    %6 = arith.addf %2, %5 : vector<8x128xf32>
    %cst_5 = arith.constant 0.000000e+00 : f32
    %7 = vector.broadcast %cst_5 : f32 to vector<8x128xf32>
    %8 = arith.maximumf %6, %7 : vector<8x128xf32>
    %9 = arith.truncf %8 : vector<8x128xf32> to vector<8x128xbf16>
    %c0_6 = arith.constant 0 : index
    %c0_7 = arith.constant 0 : index
    %10 = vector.load %arg4[%c0_6, %c0_7] : memref<128x128xbf16, #tpu.memory_space<vmem>>, vector<128x128xbf16>
    %cst_8 = arith.constant dense<0.000000e+00> : vector<8x128xf32>
    %11 = tpu.matmul %9, %10, %cst_8 {dimension_numbers = #tpu.dot_dimension_numbers<[1], [0], [0], [1], [0, 0, 1, 1], [], []>} : vector<8x128xbf16>, vector<128x128xbf16>, vector<8x128xf32> -> vector<8x128xf32>
    %c0_9 = arith.constant 0 : index
    %c0_10 = arith.constant 0 : index
    %12 = vector.load %arg5[%c0_9, %c0_10] : memref<1x128xbf16, #tpu.memory_space<vmem>>, vector<1x128xbf16>
    %13 = arith.extf %12 : vector<1x128xbf16> to vector<1x128xf32>
    %14 = vector.broadcast %13 : vector<1x128xf32> to vector<8x128xf32>
    %15 = arith.addf %11, %14 : vector<8x128xf32>
    %cst_11 = arith.constant 0.000000e+00 : f32
    %16 = vector.broadcast %cst_11 : f32 to vector<8x128xf32>
    %17 = arith.maximumf %15, %16 : vector<8x128xf32>
    %18 = arith.truncf %17 : vector<8x128xf32> to vector<8x128xbf16>
    %c0_12 = arith.constant 0 : index
    %c0_13 = arith.constant 0 : index
    %19 = vector.load %arg6[%c0_12, %c0_13] : memref<128x128xbf16, #tpu.memory_space<vmem>>, vector<128x128xbf16>
    %cst_14 = arith.constant dense<0.000000e+00> : vector<8x128xf32>
    %20 = tpu.matmul %18, %19, %cst_14 {dimension_numbers = #tpu.dot_dimension_numbers<[1], [0], [0], [1], [0, 0, 1, 1], [], []>} : vector<8x128xbf16>, vector<128x128xbf16>, vector<8x128xf32> -> vector<8x128xf32>
    %c0_15 = arith.constant 0 : index
    %c0_16 = arith.constant 0 : index
    %21 = vector.load %arg7[%c0_15, %c0_16] : memref<1x128xbf16, #tpu.memory_space<vmem>>, vector<1x128xbf16>
    %22 = arith.extf %21 : vector<1x128xbf16> to vector<1x128xf32>
    %23 = vector.broadcast %22 : vector<1x128xf32> to vector<8x128xf32>
    %24 = arith.addf %20, %23 : vector<8x128xf32>
    %25 = arith.truncf %24 : vector<8x128xf32> to vector<8x128xbf16>
    %c0_17 = arith.constant 0 : index
    %c0_18 = arith.constant 0 : index
    %26 = vector.load %arg8[%c0_17, %c0_18] : memref<8x128xbf16, #tpu.memory_space<vmem>>, vector<8x128xbf16>
    tpu.vector_store %arg8[%c0_17, %c0_18], %25 {strides = array<i32>} : memref<8x128xbf16, #tpu.memory_space<vmem>>, vector<8x128xbf16>,
    return
  }
  func.func @transform_0(%arg0: i32) -> (i32, i32) {
    %c0_i32 = arith.constant 0 : i32
    %c0_i32_0 = arith.constant 0 : i32
    return %arg0, %c0_i32 : i32, i32
  }
  func.func @transform_1(%arg0: i32) -> (i32, i32) {
    %c0_i32 = arith.constant 0 : i32
    %c0_i32_0 = arith.constant 0 : i32
    %c0_i32_1 = arith.constant 0 : i32
    return %c0_i32, %c0_i32_0 : i32, i32
  }
  func.func @transform_2(%arg0: i32) -> (i32, i32) {
    %c0_i32 = arith.constant 0 : i32
    %c0_i32_0 = arith.constant 0 : i32
    %c0_i32_1 = arith.constant 0 : i32
    return %c0_i32, %c0_i32_0 : i32, i32
  }
  func.func @transform_3(%arg0: i32) -> (i32, i32) {
    %c0_i32 = arith.constant 0 : i32
    %c0_i32_0 = arith.constant 0 : i32
    %c0_i32_1 = arith.constant 0 : i32
    return %c0_i32, %c0_i32_0 : i32, i32
  }
  func.func @transform_4(%arg0: i32) -> (i32, i32) {
    %c0_i32 = arith.constant 0 : i32
    %c0_i32_0 = arith.constant 0 : i32
    %c0_i32_1 = arith.constant 0 : i32
    return %c0_i32, %c0_i32_0 : i32, i32
  }
  func.func @transform_5(%arg0: i32) -> (i32, i32) {
    %c0_i32 = arith.constant 0 : i32
    %c0_i32_0 = arith.constant 0 : i32
    %c0_i32_1 = arith.constant 0 : i32
    return %c0_i32, %c0_i32_0 : i32, i32
  }
  func.func @transform_6(%arg0: i32) -> (i32, i32) {
    %c0_i32 = arith.constant 0 : i32
    %c0_i32_0 = arith.constant 0 : i32
    %c0_i32_1 = arith.constant 0 : i32
    return %c0_i32, %c0_i32_0 : i32, i32
  }
  func.func @transform_7(%arg0: i32) -> (i32, i32) {
    %c0_i32 = arith.constant 0 : i32
    %c0_i32_0 = arith.constant 0 : i32
    return %arg0, %c0_i32 : i32, i32
  }
}

</mosaic_0001>

<llo_original>
// kernel: tpu_custom_call.1
$region0: #{tpu_custom_call.1}
  #allocation0 [shape = 'u32[]', space=smem, size = 0x4, offset = 0x4, fixed_abs, tag = 'smem constant byte address 0x4 - core index']
  #allocation1 [shape = 'u32[144,128]{1,0:T(1,128)}', space=vmem, size = 0x12000, scoped, tag = 'internal scratch']
  %s0 = inlined_call_operand.hbm [shape: bf16[8,128], index: 0, kind: input, shape index: {}]
  %s1 = inlined_call_operand.hbm [shape: bf16[128,128], index: 1, kind: input, shape index: {}]
  %s2 = inlined_call_operand.vmem [shape: bf16[1,128], index: 2, kind: input, shape index: {}]
  %s3 = inlined_call_operand.hbm [shape: bf16[128,128], index: 3, kind: input, shape index: {}]
  %s4 = inlined_call_operand.vmem [shape: bf16[1,128], index: 4, kind: input, shape index: {}]
  %s5 = inlined_call_operand.hbm [shape: bf16[128,128], index: 5, kind: input, shape index: {}]
  %s6 = inlined_call_operand.vmem [shape: bf16[1,128], index: 6, kind: input, shape index: {}]
  %s7 = inlined_call_operand.hbm [shape: bf16[8,128], index: 7, kind: output, shape index: {}]
  %s8 = sld [smem:[#allocation0]]
  $region54: #{tpu_custom_call.1} parent=0
    _
  %s10 = ssub.s32 1, %s8
  %s11 = scalar_select 0, %s10, %s8
  $region1: #{tpu_custom_call.1} parent=0
    #allocation2 [shape = 'u8[2048]{0}', space=vmem, size = 0x800, scoped, tag = 'input window, operand 0, single buffered']
    #allocation3 [shape = 's32[1]{0}', space=sflag, size = 0x4, scoped, tag = 'scoped memory for tpu_custom_call.1']
    #allocation4 [shape = 's32[1]{0}', space=sflag, size = 0x4, scoped, tag = 'scoped memory for tpu_custom_call.1']
    #allocation5 [shape = 'u8[32768]{0}', space=vmem, size = 0x8000, scoped, tag = 'input window, operand 1, single buffered']
    #allocation6 [shape = 's32[1]{0}', space=sflag, size = 0x4, scoped, tag = 'scoped memory for tpu_custom_call.1']
    #allocation7 [shape = 'u8[32768]{0}', space=vmem, size = 0x8000, scoped, tag = 'input window, operand 3, single buffered']
    #allocation8 [shape = 'u8[32768]{0}', space=vmem, size = 0x8000, scoped, tag = 'input window, operand 5, single buffered']
    #allocation9 [shape = 's32[1]{0}', space=sflag, size = 0x4, scoped, tag = 'scoped memory for tpu_custom_call.1']
    #allocation10 [shape = 'u8[2048]{0}', space=vmem, size = 0x800, scoped, tag = 'output window, operand 0, single buffered']
    %12 = vsyncpa [#allocation3], 0
    %13 = vsyncpa [#allocation6], 0
    %14 = vsyncpa [#allocation9], 0
    %15 = vsyncpa [#allocation4], 0
    // Predicated region
    $region2: #{tpu_custom_call.1} parent=1 // pred_check
      _
    $region3: #{tpu_custom_call.1} parent=1 // pred_check_branch
      %17 = sbr.rel (0) target = $region5
    $region4: #{tpu_custom_call.1} parent=1 // pred_region
      %s19 = ssub.s32 64, 64
      %20 = vsyncadd [#allocation3], %s19
      %s22 = sshll.u32 [#allocation2], 4
      %s23 = int_to_ptr.vmem [resolvable:$true] %s22
      %25 = dma.hbm_to_vmem [thread:$0]  %s0, 64, %s23, [#allocation3]
    $region5: #{tpu_custom_call.1} parent=1 // pred_fallthru
      _
    // Predicated region
    $region6: #{tpu_custom_call.1} parent=1 // pred_check
      _
    $region7: #{tpu_custom_call.1} parent=1 // pred_check_branch
      %27 = sbr.rel (0) target = $region9
    $region8: #{tpu_custom_call.1} parent=1 // pred_region
      %s29 = ssub.s32 1024, 1024
      %30 = vsyncadd [#allocation6], %s29
      %s31 = sshll.u32 [#allocation5], 4
      %s32 = int_to_ptr.vmem [resolvable:$true] %s31
      %37 = dma.hbm_to_vmem [thread:$0]  %s1, 1024, %s32, [#allocation6], 64, 64, 4
    $region9: #{tpu_custom_call.1} parent=1 // pred_fallthru
      _
    // Predicated region
    $region10: #{tpu_custom_call.1} parent=1 // pred_check
      _
    $region11: #{tpu_custom_call.1} parent=1 // pred_check_branch
      %39 = sbr.rel (0) target = $region13
    $region12: #{tpu_custom_call.1} parent=1 // pred_region
      _
    $region13: #{tpu_custom_call.1} parent=1 // pred_fallthru
      _
    // Predicated region
    $region14: #{tpu_custom_call.1} parent=1 // pred_check
      _
    $region15: #{tpu_custom_call.1} parent=1 // pred_check_branch
      %41 = sbr.rel (0) target = $region17
    $region16: #{tpu_custom_call.1} parent=1 // pred_region
      %s43 = ssub.s32 1024, 1024
      %44 = vsyncadd [#allocation6], %s43
      %s45 = sshll.u32 [#allocation7], 4
      %s46 = int_to_ptr.vmem [resolvable:$true] %s45
      %51 = dma.hbm_to_vmem [thread:$0]  %s3, 1024, %s46, [#allocation6], 64, 64, 4
    $region17: #{tpu_custom_call.1} parent=1 // pred_fallthru
      _
    // Predicated region
    $region18: #{tpu_custom_call.1} parent=1 // pred_check
      _
    $region19: #{tpu_custom_call.1} parent=1 // pred_check_branch
      %53 = sbr.rel (0) target = $region21
    $region20: #{tpu_custom_call.1} parent=1 // pred_region
      _
    $region21: #{tpu_custom_call.1} parent=1 // pred_fallthru
      _
    // Predicated region
    $region22: #{tpu_custom_call.1} parent=1 // pred_check
      _
    $region23: #{tpu_custom_call.1} parent=1 // pred_check_branch
      %55 = sbr.rel (0) target = $region25
    $region24: #{tpu_custom_call.1} parent=1 // pred_region
      %s57 = ssub.s32 1024, 1024
      %58 = vsyncadd [#allocation9], %s57
      %s59 = sshll.u32 [#allocation8], 4
      %s60 = int_to_ptr.vmem [resolvable:$true] %s59
      %65 = dma.hbm_to_vmem [thread:$0]  %s5, 1024, %s60, [#allocation9], 64, 64, 4
    $region25: #{tpu_custom_call.1} parent=1 // pred_fallthru
      _
    // Predicated region
    $region26: #{tpu_custom_call.1} parent=1 // pred_check
      _
    $region27: #{tpu_custom_call.1} parent=1 // pred_check_branch
      %67 = sbr.rel (0) target = $region29
    $region28: #{tpu_custom_call.1} parent=1 // pred_region
      _
    $region29: #{tpu_custom_call.1} parent=1 // pred_fallthru
      _
    // Predicated region
    $region30: #{tpu_custom_call.1} parent=1 // pred_check
      _
    $region31: #{tpu_custom_call.1} parent=1 // pred_check_branch
      %69 = sbr.rel (0) target = $region33
    $region32: #{tpu_custom_call.1} parent=1 // pred_region
      %70 = dma.done [#allocation3], 64
    $region33: #{tpu_custom_call.1} parent=1 // pred_fallthru
      _
    // Predicated region
    $region34: #{tpu_custom_call.1} parent=1 // pred_check
      _
    $region35: #{tpu_custom_call.1} parent=1 // pred_check_branch
      %72 = sbr.rel (0) target = $region37
    $region36: #{tpu_custom_call.1} parent=1 // pred_region
      %73 = dma.done [#allocation6], 1024
    $region37: #{tpu_custom_call.1} parent=1 // pred_fallthru
      _
    // Predicated region
    $region38: #{tpu_custom_call.1} parent=1 // pred_check
      _
    $region39: #{tpu_custom_call.1} parent=1 // pred_check_branch
      %75 = sbr.rel (0) target = $region41
    $region40: #{tpu_custom_call.1} parent=1 // pred_region
      %76 = dma.done [#allocation6], 1024
    $region41: #{tpu_custom_call.1} parent=1 // pred_fallthru
      _
    // Predicated region
    $region42: #{tpu_custom_call.1} parent=1 // pred_check
      _
    $region43: #{tpu_custom_call.1} parent=1 // pred_check_branch
      %78 = sbr.rel (0) target = $region45
    $region44: #{tpu_custom_call.1} parent=1 // pred_region
      %79 = dma.done [#allocation9], 1024
    $region45: #{tpu_custom_call.1} parent=1 // pred_fallthru
      _
    %v81 = vld [vmem:[#allocation2] sm:$0xf]
    %v82 = vld [vmem:[#allocation5] sm:$0xf]
    %v83 = vld [vmem:[#allocation5 + $0x4] sm:$0xf]
    %v84 = vld [vmem:[#allocation5 + $0x8] sm:$0xf]
    %v85 = vld [vmem:[#allocation5 + $0xc] sm:$0xf]
    %v86 = vld [vmem:[#allocation5 + $0x10] sm:$0xf]
    %v87 = vld [vmem:[#allocation5 + $0x14] sm:$0xf]
    %v88 = vld [vmem:[#allocation5 + $0x18] sm:$0xf]
    %v89 = vld [vmem:[#allocation5 + $0x1c] sm:$0xf]
    %v90 = vld [vmem:[#allocation5 + $0x20] sm:$0xf]
    %v91 = vld [vmem:[#allocation5 + $0x24] sm:$0xf]
    %v92 = vld [vmem:[#allocation5 + $0x28] sm:$0xf]
    %v93 = vld [vmem:[#allocation5 + $0x2c] sm:$0xf]
    %v94 = vld [vmem:[#allocation5 + $0x30] sm:$0xf]
    %v95 = vld [vmem:[#allocation5 + $0x34] sm:$0xf]
    %v96 = vld [vmem:[#allocation5 + $0x38] sm:$0xf]
    %v97 = vld [vmem:[#allocation5 + $0x3c] sm:$0xf]
    %v98 = vld [vmem:[%s2] sm:$0x1]
    %v99 = vunpack.c.l.bf16 %v98
    %v100 = vlaneseq
    %v101 = vshrl.u32 %v100, 7
    %v102 = vsub.s32 0, %v101
    %v103 = vrot.slane %v99, %v102
    %v120 = vunpack.c.l.b16 %v82
    %v121 = vunpack.c.l.b16 %v83
    %v122 = vunpack.c.l.b16 %v84
    %v123 = vunpack.c.l.b16 %v85
    %v124 = vunpack.c.l.b16 %v86
    %v125 = vunpack.c.l.b16 %v87
    %v126 = vunpack.c.l.b16 %v88
    %v127 = vunpack.c.l.b16 %v89
    %v128 = vunpack.c.l.b16 %v90
    %v129 = vunpack.c.l.b16 %v91
    %v130 = vunpack.c.l.b16 %v92
    %v131 = vunpack.c.l.b16 %v93
    %v132 = vunpack.c.l.b16 %v94
    %v133 = vunpack.c.l.b16 %v95
    %v134 = vunpack.c.l.b16 %v96
    %v135 = vunpack.c.l.b16 %v97
    %v136 = vpack.c.b16 %v121, %v120
    %v137 = vpack.c.b16 %v123, %v122
    %v138 = vpack.c.b16 %v125, %v124
    %v139 = vpack.c.b16 %v127, %v126
    %v140 = vpack.c.b16 %v129, %v128
    %v141 = vpack.c.b16 %v131, %v130
    %v142 = vpack.c.b16 %v133, %v132
    %v143 = vpack.c.b16 %v135, %v134
    %152 = vmatprep.subr.bf16.mxu0 0
    %153 = vmatpush1.bf16.msra.mxu0 %v136
    %154 = vmatprep.subr.bf16.mxu0 0
    %155 = vmatpush1.bf16.msra.mxu0 %v137
    %156 = vmatprep.subr.bf16.mxu0 0
    %157 = vmatpush1.bf16.msra.mxu0 %v138
    %158 = vmatprep.subr.bf16.mxu0 0
    %159 = vmatpush1.bf16.msra.mxu0 %v139
    %160 = vmatprep.subr.bf16.mxu0 0
    %161 = vmatpush1.bf16.msra.mxu0 %v140
    %162 = vmatprep.subr.bf16.mxu0 0
    %163 = vmatpush1.bf16.msra.mxu0 %v141
    %164 = vmatprep.subr.bf16.mxu0 0
    %165 = vmatpush1.bf16.msra.mxu0 %v142
    %166 = vmatprep.subr.bf16.mxu0 0
    %167 = vmatpush1.bf16.msra.mxu0 %v143
    %168 = vmatprep.subr.bf16.mxu0 0
    %169 = vmatpush1.bf16.msra.mxu0 0
    %170 = vmatprep.subr.bf16.mxu0 0
    %171 = vmatpush1.bf16.msra.mxu0 0
    %172 = vmatprep.subr.bf16.mxu0 0
    %173 = vmatpush1.bf16.msra.mxu0 0
    %174 = vmatprep.subr.bf16.mxu0 0
    %175 = vmatpush1.bf16.msra.mxu0 0
    %176 = vmatprep.subr.bf16.mxu0 0
    %177 = vmatpush1.bf16.msra.mxu0 0
    %178 = vmatprep.subr.bf16.mxu0 0
    %179 = vmatpush1.bf16.msra.mxu0 0
    %180 = vmatprep.subr.bf16.mxu0 0
    %181 = vmatpush1.bf16.msra.mxu0 0
    %182 = vmatprep.subr.bf16.mxu0 0
    %183 = vmatpush1.bf16.msra.mxu0 0
    %184 = vmatprep.mubr.bf16.mxu0 0
    %185 = vmatmul.mubr.bf16.gmra.mrb[0].mxu0 %v81
    %v186 = vpop.f32.mrb[0].mxu0
    %v187 = vadd.f32 %v103, %v186
    %v188 = vpop.f32.mrb[0].mxu0
    %v189 = vpop.f32.mrb[0].mxu0
    %v190 = vpop.f32.mrb[0].mxu0
    %191 = vdwg.mxu0
    %v192 = vmax.f32 %v187, 0.0
    %v193 = vpack.c.bf16 %v192, %v192
    %v194 = vld [vmem:[#allocation7] sm:$0xf]
    %v195 = vld [vmem:[#allocation7 + $0x4] sm:$0xf]
    %v196 = vld [vmem:[#allocation7 + $0x8] sm:$0xf]
    %v197 = vld [vmem:[#allocation7 + $0xc] sm:$0xf]
    %v198 = vld [vmem:[#allocation7 + $0x10] sm:$0xf]
    %v199 = vld [vmem:[#allocation7 + $0x14] sm:$0xf]
    %v200 = vld [vmem:[#allocation7 + $0x18] sm:$0xf]
    %v201 = vld [vmem:[#allocation7 + $0x1c] sm:$0xf]
    %v202 = vld [vmem:[#allocation7 + $0x20] sm:$0xf]
    %v203 = vld [vmem:[#allocation7 + $0x24] sm:$0xf]
    %v204 = vld [vmem:[#allocation7 + $0x28] sm:$0xf]
    %v205 = vld [vmem:[#allocation7 + $0x2c] sm:$0xf]
    %v206 = vld [vmem:[#allocation7 + $0x30] sm:$0xf]
    %v207 = vld [vmem:[#allocation7 + $0x34] sm:$0xf]
    %v208 = vld [vmem:[#allocation7 + $0x38] sm:$0xf]
    %v209 = vld [vmem:[#allocation7 + $0x3c] sm:$0xf]
    %v210 = vld [vmem:[%s4] sm:$0x1]
    %v211 = vunpack.c.l.bf16 %v210
    %v212 = vlaneseq
    %v213 = vshrl.u32 %v212, 7
    %v214 = vsub.s32 0, %v213
    %v215 = vrot.slane %v211, %v214
    %v232 = vunpack.c.l.b16 %v194
    %v233 = vunpack.c.l.b16 %v195
    %v234 = vunpack.c.l.b16 %v196
    %v235 = vunpack.c.l.b16 %v197
    %v236 = vunpack.c.l.b16 %v198
    %v237 = vunpack.c.l.b16 %v199
    %v238 = vunpack.c.l.b16 %v200
    %v239 = vunpack.c.l.b16 %v201
    %v240 = vunpack.c.l.b16 %v202
    %v241 = vunpack.c.l.b16 %v203
    %v242 = vunpack.c.l.b16 %v204
    %v243 = vunpack.c.l.b16 %v205
    %v244 = vunpack.c.l.b16 %v206
    %v245 = vunpack.c.l.b16 %v207
    %v246 = vunpack.c.l.b16 %v208
    %v247 = vunpack.c.l.b16 %v209
    %v248 = vpack.c.b16 %v233, %v232
    %v249 = vpack.c.b16 %v235, %v234
    %v250 = vpack.c.b16 %v237, %v236
    %v251 = vpack.c.b16 %v239, %v238
    %v252 = vpack.c.b16 %v241, %v240
    %v253 = vpack.c.b16 %v243, %v242
    %v254 = vpack.c.b16 %v245, %v244
    %v255 = vpack.c.b16 %v247, %v246
    %264 = vmatprep.subr.bf16.mxu0 0
    %265 = vmatpush1.bf16.msra.mxu0 %v248
    %266 = vmatprep.subr.bf16.mxu0 0
    %267 = vmatpush1.bf16.msra.mxu0 %v249
    %268 = vmatprep.subr.bf16.mxu0 0
    %269 = vmatpush1.bf16.msra.mxu0 %v250
    %270 = vmatprep.subr.bf16.mxu0 0
    %271 = vmatpush1.bf16.msra.mxu0 %v251
    %272 = vmatprep.subr.bf16.mxu0 0
    %273 = vmatpush1.bf16.msra.mxu0 %v252
    %274 = vmatprep.subr.bf16.mxu0 0
    %275 = vmatpush1.bf16.msra.mxu0 %v253
    %276 = vmatprep.subr.bf16.mxu0 0
    %277 = vmatpush1.bf16.msra.mxu0 %v254
    %278 = vmatprep.subr.bf16.mxu0 0
    %279 = vmatpush1.bf16.msra.mxu0 %v255
    %280 = vmatprep.subr.bf16.mxu0 0
    %281 = vmatpush1.bf16.msra.mxu0 0
    %282 = vmatprep.subr.bf16.mxu0 0
    %283 = vmatpush1.bf16.msra.mxu0 0
    %284 = vmatprep.subr.bf16.mxu0 0
    %285 = vmatpush1.bf16.msra.mxu0 0
    %286 = vmatprep.subr.bf16.mxu0 0
    %287 = vmatpush1.bf16.msra.mxu0 0
    %288 = vmatprep.subr.bf16.mxu0 0
    %289 = vmatpush1.bf16.msra.mxu0 0
    %290 = vmatprep.subr.bf16.mxu0 0
    %291 = vmatpush1.bf16.msra.mxu0 0
    %292 = vmatprep.subr.bf16.mxu0 0
    %293 = vmatpush1.bf16.msra.mxu0 0
    %294 = vmatprep.subr.bf16.mxu0 0
    %295 = vmatpush1.bf16.msra.mxu0 0
    %296 = vmatprep.mubr.bf16.mxu0 0
    %297 = vmatmul.mubr.bf16.gmra.mrb[0].mxu0 %v193
    %v298 = vpop.f32.mrb[0].mxu0
    %v299 = vadd.f32 %v215, %v298
    %v300 = vpop.f32.mrb[0].mxu0
    %v301 = vpop.f32.mrb[0].mxu0
    %v302 = vpop.f32.mrb[0].mxu0
    %303 = vdwg.mxu0
    %v304 = vmax.f32 %v299, 0.0
    %v305 = vpack.c.bf16 %v304, %v304
    %v306 = vld [vmem:[#allocation8] sm:$0xf]
    %v307 = vld [vmem:[#allocation8 + $0x4] sm:$0xf]
    %v308 = vld [vmem:[#allocation8 + $0x8] sm:$0xf]
    %v309 = vld [vmem:[#allocation8 + $0xc] sm:$0xf]
    %v310 = vld [vmem:[#allocation8 + $0x10] sm:$0xf]
    %v311 = vld [vmem:[#allocation8 + $0x14] sm:$0xf]
    %v312 = vld [vmem:[#allocation8 + $0x18] sm:$0xf]
    %v313 = vld [vmem:[#allocation8 + $0x1c] sm:$0xf]
    %v314 = vld [vmem:[#allocation8 + $0x20] sm:$0xf]
    %v315 = vld [vmem:[#allocation8 + $0x24] sm:$0xf]
    %v316 = vld [vmem:[#allocation8 + $0x28] sm:$0xf]
    %v317 = vld [vmem:[#allocation8 + $0x2c] sm:$0xf]
    %v318 = vld [vmem:[#allocation8 + $0x30] sm:$0xf]
    %v319 = vld [vmem:[#allocation8 + $0x34] sm:$0xf]
    %v320 = vld [vmem:[#allocation8 + $0x38] sm:$0xf]
    %v321 = vld [vmem:[#allocation8 + $0x3c] sm:$0xf]
    %v322 = vld [vmem:[%s6] sm:$0x1]
    %v323 = vunpack.c.l.bf16 %v322
    %v324 = vlaneseq
    %v325 = vshrl.u32 %v324, 7
    %v326 = vsub.s32 0, %v325
    %v327 = vrot.slane %v323, %v326
    %v344 = vunpack.c.l.b16 %v306
    %v345 = vunpack.c.l.b16 %v307
    %v346 = vunpack.c.l.b16 %v308
    %v347 = vunpack.c.l.b16 %v309
    %v348 = vunpack.c.l.b16 %v310
    %v349 = vunpack.c.l.b16 %v311
    %v350 = vunpack.c.l.b16 %v312
    %v351 = vunpack.c.l.b16 %v313
    %v352 = vunpack.c.l.b16 %v314
    %v353 = vunpack.c.l.b16 %v315
    %v354 = vunpack.c.l.b16 %v316
    %v355 = vunpack.c.l.b16 %v317
    %v356 = vunpack.c.l.b16 %v318
    %v357 = vunpack.c.l.b16 %v319
    %v358 = vunpack.c.l.b16 %v320
    %v359 = vunpack.c.l.b16 %v321
    %v360 = vpack.c.b16 %v345, %v344
    %v361 = vpack.c.b16 %v347, %v346
    %v362 = vpack.c.b16 %v349, %v348
    %v363 = vpack.c.b16 %v351, %v350
    %v364 = vpack.c.b16 %v353, %v352
    %v365 = vpack.c.b16 %v355, %v354
    %v366 = vpack.c.b16 %v357, %v356
    %v367 = vpack.c.b16 %v359, %v358
    %376 = vmatprep.subr.bf16.mxu0 0
    %377 = vmatpush1.bf16.msra.mxu0 %v360
    %378 = vmatprep.subr.bf16.mxu0 0
    %379 = vmatpush1.bf16.msra.mxu0 %v361
    %380 = vmatprep.subr.bf16.mxu0 0
    %381 = vmatpush1.bf16.msra.mxu0 %v362
    %382 = vmatprep.subr.bf16.mxu0 0
    %383 = vmatpush1.bf16.msra.mxu0 %v363
    %384 = vmatprep.subr.bf16.mxu0 0
    %385 = vmatpush1.bf16.msra.mxu0 %v364
    %386 = vmatprep.subr.bf16.mxu0 0
    %387 = vmatpush1.bf16.msra.mxu0 %v365
    %388 = vmatprep.subr.bf16.mxu0 0
    %389 = vmatpush1.bf16.msra.mxu0 %v366
    %390 = vmatprep.subr.bf16.mxu0 0
    %391 = vmatpush1.bf16.msra.mxu0 %v367
    %392 = vmatprep.subr.bf16.mxu0 0
    %393 = vmatpush1.bf16.msra.mxu0 0
    %394 = vmatprep.subr.bf16.mxu0 0
    %395 = vmatpush1.bf16.msra.mxu0 0
    %396 = vmatprep.subr.bf16.mxu0 0
    %397 = vmatpush1.bf16.msra.mxu0 0
    %398 = vmatprep.subr.bf16.mxu0 0
    %399 = vmatpush1.bf16.msra.mxu0 0
    %400 = vmatprep.subr.bf16.mxu0 0
    %401 = vmatpush1.bf16.msra.mxu0 0
    %402 = vmatprep.subr.bf16.mxu0 0
    %403 = vmatpush1.bf16.msra.mxu0 0
    %404 = vmatprep.subr.bf16.mxu0 0
    %405 = vmatpush1.bf16.msra.mxu0 0
    %406 = vmatprep.subr.bf16.mxu0 0
    %407 = vmatpush1.bf16.msra.mxu0 0
    %408 = vmatprep.mubr.bf16.mxu0 0
    %409 = vmatmul.mubr.bf16.gmra.mrb[0].mxu0 %v305
    %v410 = vpop.f32.mrb[0].mxu0
    %v411 = vadd.f32 %v327, %v410
    %v412 = vpop.f32.mrb[0].mxu0
    %v413 = vpop.f32.mrb[0].mxu0
    %v414 = vpop.f32.mrb[0].mxu0
    %415 = vdwg.mxu0
    %v416 = vpack.c.bf16 %v411, %v411
    %417 = vst [vmem:[#allocation10] sm:$0xf] %v416
    // Predicated region
    $region46: #{tpu_custom_call.1} parent=1 // pred_check
      _
    $region47: #{tpu_custom_call.1} parent=1 // pred_check_branch
      %419 = sbr.rel (0) target = $region49
    $region48: #{tpu_custom_call.1} parent=1 // pred_region
      %s421 = ssub.s32 64, 64
      %422 = vsyncadd [#allocation4], %s421
      %s424 = sshll.u32 [#allocation10], 4
      %s425 = int_to_ptr.vmem [resolvable:$true] %s424
      %427 = dma.vmem_to_hbm [thread:$0]  %s425, 64, %s7, [#allocation4]
    $region49: #{tpu_custom_call.1} parent=1 // pred_fallthru
      _
    // Predicated region
    $region50: #{tpu_custom_call.1} parent=1 // pred_check
      _
    $region51: #{tpu_custom_call.1} parent=1 // pred_check_branch
      %429 = sbr.rel (0) target = $region53
    $region52: #{tpu_custom_call.1} parent=1 // pred_region
      %430 = dma.done [#allocation4], 64
    $region53: #{tpu_custom_call.1} parent=1 // pred_fallthru
      _
    %431 = vsyncpa [#allocation3], 1
    %432 = vsyncpa [#allocation6], 1
    %433 = vsyncpa [#allocation9], 1
    %434 = vsyncpa [#allocation4], 1

</llo_original>
